<compile_context>
chip_gen: v5e
topology: v5e:2x2
jax: 0.10.0
libtpu: 0.0.40
codegen_flags: <defaults>
</compile_context>

<pallas_src>
import functools

import jax
import jax.numpy as jnp
from jax.experimental import pallas as pl
from jax.experimental.pallas import tpu as pltpu

_LANES = 128


def _gap_kernel(x_ref, o_ref, acc_ref, *, inv_hw, hw, hw_block):
    # x_ref:   (rows_block, hw_block) input tile, native dtype
    # o_ref:   (rows_block, 1) output tile (resident across the hw axis)
    # acc_ref: (rows_block, 128) f32 lane-wide partial-sum accumulator
    hw_idx = pl.program_id(1)

    @pl.when(hw_idx == 0)
    def _():
        acc_ref[...] = jnp.zeros_like(acc_ref)

    x = x_ref[...].astype(jnp.float32)

    # Mask padded columns of a partial trailing hw block. Statically elided
    # when hw_block divides hw (including every single-hw-step case).
    if hw % hw_block != 0:
        col = hw_idx * hw_block + jax.lax.broadcasted_iota(jnp.int32, x.shape, 1)
        x = jnp.where(col < hw, x, 0.0)

    # Lane-aligned, 128-wide VPU adds only (no per-step cross-lane XLU reduce)
    # so the steady state stays HBM-bandwidth bound.
    n_full = x.shape[-1] // _LANES
    rem = x.shape[-1] % _LANES
    if n_full > 0:
        partial = x[:, 0:_LANES]
        for ci in range(1, n_full):  # static unrolled, lane-aligned slices
            partial = partial + x[:, ci * _LANES:(ci + 1) * _LANES]
        acc_ref[...] += partial
    if rem > 0:
        # Sub-128 tail (e.g. hw < 128 or hw not a multiple of 128): accumulate
        # into the low lanes; untouched lanes stay zero from the init.
        acc_ref[:, 0:rem] += x[:, n_full * _LANES:]

    @pl.when(hw_idx == pl.num_programs(1) - 1)
    def _():
        # Single cross-lane (XLU) reduction per row block, scaled by the TRUE
        # 1/(H*W), so masked / never-touched lanes cannot bias the mean.
        total = jnp.sum(acc_ref[...], axis=-1, keepdims=True)  # (rows_block, 1)
        o_ref[...] = (total * inv_hw).astype(o_ref.dtype)


def global_avg_pool(x, *, rows_block_target=256, hw_block_target=2048):
    """(N, C, H, W) -> (N, C): mean over the spatial dims (Pallas TPU)."""
    N, C, H, W = x.shape
    rows = N * C
    hw = H * W

    itemsize = jnp.dtype(x.dtype).itemsize
    sub = {4: 8, 2: 16, 1: 32}.get(itemsize, 8)

    # --- Block sizing: every case is either the full dim or (8k, 128k). ---
    hw_block_target = max(_LANES, (hw_block_target // _LANES) * _LANES)
    rows_block_target = max(sub, (rows_block_target // sub) * sub)

    # hw (lane / reduction) axis: whole axis in one step when it fits,
    # otherwise a 128-aligned streaming block with a masked trailing block.
    hw_block = hw if hw <= hw_block_target else hw_block_target

    # rows (sublane) axis: whole axis when it fits, otherwise a packed
    # multiple-of-sublane block; trailing garbage rows are discarded by the
    # out-of-bounds output-write semantics.
    rows_block = rows if rows <= rows_block_target else rows_block_target

    grid = (pl.cdiv(rows, rows_block), pl.cdiv(hw, hw_block))

    x2 = x.reshape(rows, hw)  # row-major: free relayout, no copy

    kernel = functools.partial(
        _gap_kernel, inv_hw=1.0 / float(hw), hw=hw, hw_block=hw_block)

    out = pl.pallas_call(
        kernel,
        out_shape=jax.ShapeDtypeStruct((rows, 1), x.dtype),
        grid_spec=pltpu.PrefetchScalarGridSpec(
            num_scalar_prefetch=0,
            grid=grid,
            in_specs=[pl.BlockSpec((rows_block, hw_block), lambda r, h: (r, h))],
            out_specs=pl.BlockSpec((rows_block, 1), lambda r, h: (r, 0)),
            scratch_shapes=[pltpu.VMEM((rows_block, _LANES), jnp.float32)],
        ),
        compiler_params=pltpu.CompilerParams(
            dimension_semantics=("parallel", "arbitrary"),
        ),
        cost_estimate=pl.CostEstimate(
            flops=rows * hw,
            transcendentals=0,
            bytes_accessed=rows * hw * itemsize + rows * itemsize,
        ),
    )(x2)

    return out.reshape(N, C)


if __name__ == "__main__":
    key = jax.random.PRNGKey(0)
    N, C, H, W = 2, 4, 16, 16
    x = jax.random.normal(key, (N, C, H, W), dtype=jnp.float32)

    out = jax.block_until_ready(global_avg_pool(x))
    ref = jnp.mean(x.reshape(N, C, -1), axis=-1)
    assert out.shape == (N, C)
    assert jnp.allclose(out, ref, atol=1e-5, rtol=1e-5)

    # Non-aligned rows / hw, bf16 input (single hw step, sub-128 tail path).
    x2 = jax.random.normal(jax.random.PRNGKey(1), (3, 5, 7, 7), dtype=jnp.bfloat16)
    out2 = jax.block_until_ready(global_avg_pool(x2))
    ref2 = jnp.mean(x2.astype(jnp.float32).reshape(3, 5, -1), axis=-1)
    assert out2.shape == (3, 5)
    assert jnp.allclose(out2.astype(jnp.float32), ref2, atol=2e-2, rtol=2e-2)

    # hw > hw_block: multi-step reduction with a masked trailing hw block.
    x3 = jax.random.normal(jax.random.PRNGKey(2), (2, 3, 50, 50), dtype=jnp.float32)
    out3 = jax.block_until_ready(global_avg_pool(x3))
    ref3 = jnp.mean(x3.reshape(2, 3, -1), axis=-1)
    assert jnp.allclose(out3, ref3, atol=1e-5, rtol=1e-5)

    # rows > rows_block: partial trailing row block + tiny hw.
    x4 = jax.random.normal(jax.random.PRNGKey(3), (8, 40, 4, 4), dtype=jnp.float32)
    out4 = jax.block_until_ready(global_avg_pool(x4))
    ref4 = jnp.mean(x4.reshape(8, 40, -1), axis=-1)
    assert jnp.allclose(out4, ref4, atol=1e-5, rtol=1e-5)

    print("KERNEL_OK")
</pallas_src>

<mosaic_0001>
module attributes {stable_mosaic.version = 11 : i64} {
  func.func @_gap_kernel(%arg0: i32, %arg1: i32, %arg2: memref<8x256xf32, #tpu.memory_space<vmem>>, %arg3: memref<8x1xf32, #tpu.memory_space<vmem>>, %arg4: memref<8x128xf32, #tpu.memory_space<vmem>>) attributes {dimension_semantics = [#tpu.dimension_semantics<parallel>, #tpu.dimension_semantics<arbitrary>], iteration_bounds = array<i64: 1, 1>, scalar_prefetch = 0 : i64, scratch_operands = 1 : i64, tpu.core_type = #tpu.core_type<tc>, window_params = [{transform_indices = @transform_0, window_bounds = array<i64: 8, 256>}, {transform_indices = @transform_1, window_bounds = array<i64: 8, 1>}]} {
    %c0_i32 = arith.constant 0 : i32
    %0 = arith.cmpi eq, %arg1, %c0_i32 : i32
    %1 = arith.extui %0 : i1 to i32
    %c0_i32_0 = arith.constant 0 : i32
    %2 = arith.cmpi ne, %1, %c0_i32_0 : i32
    scf.if %2 {
      %cst = arith.constant 0.000000e+00 : f32
      %13 = vector.broadcast %cst : f32 to vector<8x128xf32>
      %c0_8 = arith.constant 0 : index
      %c0_9 = arith.constant 0 : index
      %14 = vector.load %arg4[%c0_8, %c0_9] : memref<8x128xf32, #tpu.memory_space<vmem>>, vector<8x128xf32>
      tpu.vector_store %arg4[%c0_8, %c0_9], %13 {strides = array<i32>} : memref<8x128xf32, #tpu.memory_space<vmem>>, vector<8x128xf32>,
    } else {
    }
    %c0 = arith.constant 0 : index
    %c0_1 = arith.constant 0 : index
    %3 = vector.load %arg2[%c0, %c0_1] : memref<8x256xf32, #tpu.memory_space<vmem>>, vector<8x256xf32>
    %4 = vector.extract_strided_slice %3 {offsets = [0, 0], sizes = [8, 128], strides = [1, 1]} : vector<8x256xf32> to vector<8x128xf32>
    %5 = vector.extract_strided_slice %3 {offsets = [0, 128], sizes = [8, 128], strides = [1, 1]} : vector<8x256xf32> to vector<8x128xf32>
    %6 = arith.addf %4, %5 : vector<8x128xf32>
    %c0_2 = arith.constant 0 : index
    %c0_3 = arith.constant 0 : index
    %7 = vector.load %arg4[%c0_2, %c0_3] : memref<8x128xf32, #tpu.memory_space<vmem>>, vector<8x128xf32>
    %8 = arith.addf %7, %6 : vector<8x128xf32>
    %c0_4 = arith.constant 0 : index
    %c0_5 = arith.constant 0 : index
    %9 = vector.load %arg4[%c0_4, %c0_5] : memref<8x128xf32, #tpu.memory_space<vmem>>, vector<8x128xf32>
    tpu.vector_store %arg4[%c0_4, %c0_5], %8 {strides = array<i32>} : memref<8x128xf32, #tpu.memory_space<vmem>>, vector<8x128xf32>,
    %c0_i32_6 = arith.constant 0 : i32
    %10 = arith.cmpi eq, %arg1, %c0_i32_6 : i32
    %11 = arith.extui %10 : i1 to i32
    %c0_i32_7 = arith.constant 0 : i32
    %12 = arith.cmpi ne, %11, %c0_i32_7 : i32
    scf.if %12 {
      %c0_8 = arith.constant 0 : index
      %c0_9 = arith.constant 0 : index
      %13 = vector.load %arg4[%c0_8, %c0_9] : memref<8x128xf32, #tpu.memory_space<vmem>>, vector<8x128xf32>
      %cst = arith.constant dense<0.000000e+00> : vector<8xf32>
      %14 = vector.multi_reduction <add>, %13, %cst [1] : vector<8x128xf32> to vector<8xf32>
      %15 = vector.shape_cast %14 : vector<8xf32> to vector<8x1xf32>
      %cst_10 = arith.constant 3.906250e-03 : f32
      %16 = vector.broadcast %cst_10 : f32 to vector<8x1xf32>
      %17 = arith.mulf %15, %16 : vector<8x1xf32>
      %c0_11 = arith.constant 0 : index
      %c0_12 = arith.constant 0 : index
      %18 = vector.load %arg3[%c0_11, %c0_12] : memref<8x1xf32, #tpu.memory_space<vmem>>, vector<8x1xf32>
      tpu.vector_store %arg3[%c0_11, %c0_12], %17 {strides = array<i32>} : memref<8x1xf32, #tpu.memory_space<vmem>>, vector<8x1xf32>,
    } else {
    }
    return
  }
  func.func @transform_0(%arg0: i32, %arg1: i32) -> (i32, i32) {
    %c0_i32 = arith.constant 0 : i32
    return %arg0, %arg1 : i32, i32
  }
  func.func @transform_1(%arg0: i32, %arg1: i32) -> (i32, i32) {
    %c0_i32 = arith.constant 0 : i32
    %c0_i32_0 = arith.constant 0 : i32
    return %arg0, %c0_i32 : i32, i32
  }
}

</mosaic_0001>

<llo_original>
// kernel: tpu_custom_call.1
$region0: #{tpu_custom_call.1}
  #allocation0 [shape = 'u32[]', space=smem, size = 0x4, offset = 0x4, fixed_abs, tag = 'smem constant byte address 0x4 - core index']
  #allocation1 [shape = 'u32[72,128]{1,0:T(1,128)}', space=vmem, size = 0x9000, scoped, tag = 'internal scratch']
  #allocation2 [shape = 'f32[8,128]{1,0:T(8,128)}', space=vmem, size = 0x1000, scoped, tag = 'scratch operand']
  %s0 = inlined_call_operand.hbm [shape: f32[8,256], index: 0, kind: input, shape index: {}]
  %s1 = inlined_call_operand.vmem [shape: f32[8,1], index: 1, kind: output, shape index: {}]
  %s2 = sld [smem:[#allocation0]]
  $region26: #{tpu_custom_call.1} parent=0
    _
  %s4 = ssub.s32 1, %s2
  %s5 = scalar_select 0, %s4, %s2
  $region1: #{tpu_custom_call.1} parent=0
    #allocation3 [shape = 'u8[8192]{0}', space=vmem, size = 0x2000, scoped, tag = 'input window, operand 0, single buffered']
    #allocation4 [shape = 's32[1]{0}', space=sflag, size = 0x4, scoped, tag = 'scoped memory for tpu_custom_call.1']
    %6 = vsyncpa [#allocation4], 0
    // Predicated region
    $region2: #{tpu_custom_call.1} parent=1 // pred_check
      _
    $region3: #{tpu_custom_call.1} parent=1 // pred_check_branch
      %8 = sbr.rel (0) target = $region5
    $region4: #{tpu_custom_call.1} parent=1 // pred_region
      %10 = vsyncadd [#allocation4], 0
      %s12 = sshll.u32 %s0, 4
      %s13 = int_to_ptr.hbm [resolvable:$true] %s12
      %s14 = sshll.u32 [#allocation3], 4
      %s15 = int_to_ptr.vmem [resolvable:$true] %s14
      %17 = dma.hbm_to_vmem [thread:$0]  %s13, 256, %s15, [#allocation4]
    $region5: #{tpu_custom_call.1} parent=1 // pred_fallthru
      _
    // Predicated region
    $region6: #{tpu_custom_call.1} parent=1 // pred_check
      _
    $region7: #{tpu_custom_call.1} parent=1 // pred_check_branch
      %19 = sbr.rel (0) target = $region9
    $region8: #{tpu_custom_call.1} parent=1 // pred_region
      %21 = dma.done [#allocation4], 256
    $region9: #{tpu_custom_call.1} parent=1 // pred_fallthru
      _
    %p22 = scmp.eq.s32.totalorder 0, 0
    // Predicated region
    $region10: #{tpu_custom_call.1} parent=1 // pred_check
      %p23 = pneg %p22
    $region11: #{tpu_custom_call.1} parent=1 // pred_check_branch
      %25 = sbr.rel (%p23) target = $region13
    $region12: #{tpu_custom_call.1} parent=1 // pred_region
      %26 = vst [vmem:[#allocation2] sm:$0xff] 0.0
    $region13: #{tpu_custom_call.1} parent=1 // pred_fallthru
      _
    %v27 = vld [vmem:[#allocation3] sm:$0xff]
    %v28 = vld [vmem:[#allocation3 + $0x8] sm:$0xff]
    %v29 = vadd.f32 %v27, %v28
    %v30 = vld [vmem:[#allocation2] sm:$0xff]
    %v31 = vadd.f32 %v30, %v29
    %32 = vst [vmem:[#allocation2] sm:$0xff] %v31
    // Predicated region
    $region14: #{tpu_custom_call.1} parent=1 // pred_check
      %p33 = pneg %p22
    $region15: #{tpu_custom_call.1} parent=1 // pred_check_branch
      %35 = sbr.rel (%p33) target = $region17
    $region16: #{tpu_custom_call.1} parent=1 // pred_region
      %v36 = vld [vmem:[#allocation2] sm:$0xff]
      %37 = vadd.xlane.f32.xlu0 %v36
      %v38 = vpop.xlane.xlu0 %37
      %v39 = vmul.f32 %v38, 0.00390625
      %vm40 = vcmask 7168
      %41 = vst.msk [vmem:[%s1] sm:$0xff] %vm40, %v39
    $region17: #{tpu_custom_call.1} parent=1 // pred_fallthru
      _
    // Predicated region
    $region18: #{tpu_custom_call.1} parent=1 // pred_check
      _
    $region19: #{tpu_custom_call.1} parent=1 // pred_check_branch
      %43 = sbr.rel (0) target = $region21
    $region20: #{tpu_custom_call.1} parent=1 // pred_region
      _
    $region21: #{tpu_custom_call.1} parent=1 // pred_fallthru
      _
    // Predicated region
    $region22: #{tpu_custom_call.1} parent=1 // pred_check
      _
    $region23: #{tpu_custom_call.1} parent=1 // pred_check_branch
      %45 = sbr.rel (0) target = $region25
    $region24: #{tpu_custom_call.1} parent=1 // pred_region
      _
    $region25: #{tpu_custom_call.1} parent=1 // pred_fallthru
      _
    %46 = vsyncpa [#allocation4], 1

</llo_original>
